<compile_context>
chip_gen: v5e
topology: v5e:2x2
jax: 0.10.0
libtpu: 0.0.40
codegen_flags: <defaults>
</compile_context>

<pallas_src>
import math

import jax
import jax.numpy as jnp
import numpy as np
from jax.experimental import pallas as pl
from jax.experimental.pallas import tpu as pltpu

D = 512  # hardcoded channel dim in mfTwoStream.forward: x.view(B, 512, -1)


def mf_two_stream_kernel(u_ref, x1_ref, x2_ref, o_ref, acc_ref):
    # u_ref:   (K, D)       factor matrix, resident across the whole grid
    # x1_ref:  (TB, D, TL)  natural-layout tile of stream 1
    # x2_ref:  (TB, D, TL)  natural-layout tile of stream 2
    # o_ref:   (TB, K)      output block (resident across the L axis)
    # acc_ref: (TB, K) f32  partial sums over the L grid axis
    @pl.when(pl.program_id(1) == 0)
    def _():
        acc_ref[...] = jnp.zeros_like(acc_ref)

    u = u_ref[...]                                            # (K, D)
    tb = x1_ref.shape[0]
    u_b = jnp.broadcast_to(u[None], (tb,) + u.shape)          # (TB, K, D)

    # z[b, k, l] = sum_d U[k, d] * x[b, d, l]  -- contraction over D on the MXU
    # (U has D on lanes, x has D on sublanes: canonical feed, no transposes).
    z1 = jnp.einsum("bkd,bdl->bkl", u_b, x1_ref[...],
                    preferred_element_type=jnp.float32)       # (TB, K, TL)
    z2 = jnp.einsum("bkd,bdl->bkl", u_b, x2_ref[...],
                    preferred_element_type=jnp.float32)       # (TB, K, TL)

    # Lane-axis (XLU cross-lane) reduction over the L tile, f32 accumulate.
    acc_ref[...] += jnp.sum(z1 * z2, axis=-1)                 # (TB, K)

    @pl.when(pl.program_id(1) == pl.num_programs(1) - 1)
    def _():
        o_ref[...] = acc_ref[...].astype(o_ref.dtype)


def _choose_tiles(B, L, itemsize):
    """Pick (TB, TL) satisfying the (8, 128) layout rules while keeping the
    double-buffered x1/x2 blocks well inside the scoped-VMEM default
    (16 MiB v5e / 32 MiB v6e+v7x; v7x has only 64 MiB physical)."""
    # Batch tile: the output block is (TB, K), so TB must be a multiple of 8
    # or equal to the full batch, and it must divide B exactly.
    if B <= 8:
        tb = B
    elif B % 8 == 0:
        tb = 8
    else:
        tb = B  # odd large batch: fall back to the full batch (always legal)

    # L tile (lane axis of the x blocks): a multiple of 128 that divides L,
    # or the full extent when L is not 128-aligned (legal: equals full dim).
    tl = L
    if L % 128 == 0:
        budget = 8 << 20  # bytes for 2 streams x 2 pipeline buffers of x tiles
        tl = 128
        for cand in (1024, 512, 256):
            if L % cand == 0 and 4 * tb * D * cand * itemsize <= budget:
                tl = cand
                break
    return tb, tl


def mf_two_stream(U, bias, x1, x2):
    """U: (K, D), bias: (K,) or scalar, x1/x2: (B, 512, *spatial)."""
    B = x1.shape[0]
    K = U.shape[0]
    x1r = x1.reshape(B, D, -1)          # (B, D, L)  == torch .view (no copy)
    x2r = x2.reshape(B, D, -1)
    L = x1r.shape[-1]
    Uc = jnp.asarray(U, x1r.dtype)      # cast the small factor, never the big x

    TB, TL = _choose_tiles(B, L, x1r.dtype.itemsize)

    out = pl.pallas_call(
        mf_two_stream_kernel,
        out_shape=jax.ShapeDtypeStruct((B, K), jnp.float32),
        grid_spec=pltpu.PrefetchScalarGridSpec(
            num_scalar_prefetch=0,
            grid=(B // TB, L // TL),
            in_specs=[
                pl.BlockSpec((K, D), lambda b, l: (0, 0)),          # U, resident
                pl.BlockSpec((TB, D, TL), lambda b, l: (b, 0, l)),  # x1 tile
                pl.BlockSpec((TB, D, TL), lambda b, l: (b, 0, l)),  # x2 tile
            ],
            out_specs=pl.BlockSpec((TB, K), lambda b, l: (b, 0)),
            scratch_shapes=[pltpu.VMEM((TB, K), jnp.float32)],
        ),
        compiler_params=pltpu.CompilerParams(
            dimension_semantics=("parallel", "arbitrary")),
    )(Uc, x1r, x2r)

    # bias (0 after reset_parameters) added outside the kernel; torch.squeeze
    # removes all size-1 dims.
    s = out + jnp.asarray(bias, jnp.float32)
    return jnp.squeeze(s)


if __name__ == "__main__":
    key = jax.random.PRNGKey(0)
    k_u, k_x1, k_x2 = jax.random.split(key, 3)

    B, K, H, W = 2, 16, 4, 4                 # small shapes; D=512 forced by forward()
    stdv = 1.0 / math.sqrt(math.sqrt(K))     # mfTwoStream.reset_parameters
    U = jax.random.uniform(k_u, (K, D), jnp.float32, minval=-stdv, maxval=stdv)
    bias = jnp.zeros((K,), jnp.float32)      # reset_parameters sets self.bias = 0
    x1 = jax.random.normal(k_x1, (B, D, H, W), jnp.float32)
    x2 = jax.random.normal(k_x2, (B, D, H, W), jnp.float32)

    s = mf_two_stream(U, bias, x1, x2)
    s = jax.block_until_ready(s)

    # pure-JAX reference of the PyTorch forward
    x1r = x1.reshape(B, D, -1)
    x2r = x2.reshape(B, D, -1)
    z1 = jnp.einsum("kd,bdl->bkl", U, x1r)
    z2 = jnp.einsum("kd,bdl->bkl", U, x2r)
    ref = jnp.squeeze(jnp.sum(z1 * z2, axis=2)) + bias

    np.testing.assert_allclose(np.asarray(s), np.asarray(ref), rtol=1e-4, atol=1e-4)
    print("KERNEL_OK")
</pallas_src>

<mosaic_0001>
module attributes {stable_mosaic.version = 11 : i64} {
  func.func @mf_two_stream_kernel(%arg0: i32, %arg1: i32, %arg2: memref<16x512xf32, #tpu.memory_space<vmem>>, %arg3: memref<2x512x16xf32, #tpu.memory_space<vmem>>, %arg4: memref<2x512x16xf32, #tpu.memory_space<vmem>>, %arg5: memref<2x16xf32, #tpu.memory_space<vmem>>, %arg6: memref<2x16xf32, #tpu.memory_space<vmem>>) attributes {dimension_semantics = [#tpu.dimension_semantics<parallel>, #tpu.dimension_semantics<arbitrary>], iteration_bounds = array<i64: 1, 1>, scalar_prefetch = 0 : i64, scratch_operands = 1 : i64, tpu.core_type = #tpu.core_type<tc>, window_params = [{pipeline_mode = #tpu.pipeline_mode<synchronous>, transform_indices = @transform_0, window_bounds = array<i64: 16, 512>}, {transform_indices = @transform_1, window_bounds = array<i64: 2, 512, 16>}, {transform_indices = @transform_2, window_bounds = array<i64: 2, 512, 16>}, {transform_indices = @transform_3, window_bounds = array<i64: 2, 16>}]} {
    %c0_i32 = arith.constant 0 : i32
    %0 = arith.cmpi eq, %arg1, %c0_i32 : i32
    %1 = arith.extui %0 : i1 to i32
    %c0_i32_0 = arith.constant 0 : i32
    %2 = arith.cmpi ne, %1, %c0_i32_0 : i32
    scf.if %2 {
      %cst_16 = arith.constant 0.000000e+00 : f32
      %19 = vector.broadcast %cst_16 : f32 to vector<2x16xf32>
      %c0_17 = arith.constant 0 : index
      %c0_18 = arith.constant 0 : index
      %20 = vector.load %arg6[%c0_17, %c0_18] : memref<2x16xf32, #tpu.memory_space<vmem>>, vector<2x16xf32>
      tpu.vector_store %arg6[%c0_17, %c0_18], %19 {strides = array<i32>} : memref<2x16xf32, #tpu.memory_space<vmem>>, vector<2x16xf32>,
    } else {
    }
    %c0 = arith.constant 0 : index
    %c0_1 = arith.constant 0 : index
    %3 = vector.load %arg2[%c0, %c0_1] : memref<16x512xf32, #tpu.memory_space<vmem>>, vector<16x512xf32>
    %4 = vector.shape_cast %3 : vector<16x512xf32> to vector<1x16x512xf32>
    %5 = vector.shape_cast %4 : vector<1x16x512xf32> to vector<1x16x512xf32>
    %6 = vector.broadcast %5 : vector<1x16x512xf32> to vector<2x16x512xf32>
    %c0_2 = arith.constant 0 : index
    %c0_3 = arith.constant 0 : index
    %c0_4 = arith.constant 0 : index
    %7 = vector.load %arg3[%c0_2, %c0_3, %c0_4] : memref<2x512x16xf32, #tpu.memory_space<vmem>>, vector<2x512x16xf32>
    "tpu.trace_start"() <{level = 10 : i32, message = "bkd,bdl->bkl"}> : () -> ()
    %cst = arith.constant dense<0.000000e+00> : vector<2x16x16xf32>
    %8 = tpu.matmul %6, %7, %cst {dimension_numbers = #tpu.dot_dimension_numbers<[2], [1], [1], [2], [0, 0, 0, 1, 1, 2], [0], [0]>} : vector<2x16x512xf32>, vector<2x512x16xf32>, vector<2x16x16xf32> -> vector<2x16x16xf32>
    "tpu.trace_stop"() : () -> ()
    %c0_5 = arith.constant 0 : index
    %c0_6 = arith.constant 0 : index
    %c0_7 = arith.constant 0 : index
    %9 = vector.load %arg4[%c0_5, %c0_6, %c0_7] : memref<2x512x16xf32, #tpu.memory_space<vmem>>, vector<2x512x16xf32>
    "tpu.trace_start"() <{level = 10 : i32, message = "bkd,bdl->bkl"}> : () -> ()
    %cst_8 = arith.constant dense<0.000000e+00> : vector<2x16x16xf32>
    %10 = tpu.matmul %6, %9, %cst_8 {dimension_numbers = #tpu.dot_dimension_numbers<[2], [1], [1], [2], [0, 0, 0, 1, 1, 2], [0], [0]>} : vector<2x16x512xf32>, vector<2x512x16xf32>, vector<2x16x16xf32> -> vector<2x16x16xf32>
    "tpu.trace_stop"() : () -> ()
    %c0_9 = arith.constant 0 : index
    %c0_10 = arith.constant 0 : index
    %11 = vector.load %arg6[%c0_9, %c0_10] : memref<2x16xf32, #tpu.memory_space<vmem>>, vector<2x16xf32>
    %12 = arith.mulf %8, %10 : vector<2x16x16xf32>
    %cst_11 = arith.constant dense<0.000000e+00> : vector<2x16xf32>
    %13 = vector.multi_reduction <add>, %12, %cst_11 [2] : vector<2x16x16xf32> to vector<2x16xf32>
    %14 = arith.addf %11, %13 : vector<2x16xf32>
    %c0_12 = arith.constant 0 : index
    %c0_13 = arith.constant 0 : index
    %15 = vector.load %arg6[%c0_12, %c0_13] : memref<2x16xf32, #tpu.memory_space<vmem>>, vector<2x16xf32>
    tpu.vector_store %arg6[%c0_12, %c0_13], %14 {strides = array<i32>} : memref<2x16xf32, #tpu.memory_space<vmem>>, vector<2x16xf32>,
    %c0_i32_14 = arith.constant 0 : i32
    %16 = arith.cmpi eq, %arg1, %c0_i32_14 : i32
    %17 = arith.extui %16 : i1 to i32
    %c0_i32_15 = arith.constant 0 : i32
    %18 = arith.cmpi ne, %17, %c0_i32_15 : i32
    scf.if %18 {
      %c0_16 = arith.constant 0 : index
      %c0_17 = arith.constant 0 : index
      %19 = vector.load %arg6[%c0_16, %c0_17] : memref<2x16xf32, #tpu.memory_space<vmem>>, vector<2x16xf32>
      %c0_18 = arith.constant 0 : index
      %c0_19 = arith.constant 0 : index
      %20 = vector.load %arg5[%c0_18, %c0_19] : memref<2x16xf32, #tpu.memory_space<vmem>>, vector<2x16xf32>
      tpu.vector_store %arg5[%c0_18, %c0_19], %19 {strides = array<i32>} : memref<2x16xf32, #tpu.memory_space<vmem>>, vector<2x16xf32>,
    } else {
    }
    return
  }
  func.func @transform_0(%arg0: i32, %arg1: i32) -> (i32, i32) {
    %c0_i32 = arith.constant 0 : i32
    %c0_i32_0 = arith.constant 0 : i32
    %c0_i32_1 = arith.constant 0 : i32
    return %c0_i32, %c0_i32_0 : i32, i32
  }
  func.func @transform_1(%arg0: i32, %arg1: i32) -> (i32, i32, i32) {
    %c0_i32 = arith.constant 0 : i32
    %c0_i32_0 = arith.constant 0 : i32
    return %arg0, %c0_i32, %arg1 : i32, i32, i32
  }
  func.func @transform_2(%arg0: i32, %arg1: i32) -> (i32, i32, i32) {
    %c0_i32 = arith.constant 0 : i32
    %c0_i32_0 = arith.constant 0 : i32
    return %arg0, %c0_i32, %arg1 : i32, i32, i32
  }
  func.func @transform_3(%arg0: i32, %arg1: i32) -> (i32, i32) {
    %c0_i32 = arith.constant 0 : i32
    %c0_i32_0 = arith.constant 0 : i32
    return %arg0, %c0_i32 : i32, i32
  }
}

</mosaic_0001>

<llo_original>
// kernel: tpu_custom_call.1
$region0: #{tpu_custom_call.1}
  #allocation0 [shape = 'u32[]', space=smem, size = 0x4, offset = 0x4, fixed_abs, tag = 'smem constant byte address 0x4 - core index']
  #allocation1 [shape = 'u32[72,128]{1,0:T(1,128)}', space=vmem, size = 0x9000, scoped, tag = 'internal scratch']
  #allocation2 [shape = 'f32[2,16]{1,0:T(2,128)}', space=vmem, size = 0x400, scoped, tag = 'scratch operand']
  %s0 = inlined_call_operand.vmem [shape: f32[16,512], index: 0, kind: input, shape index: {}]
  %s1 = inlined_call_operand.vmem [shape: f32[2,512,16], index: 1, kind: input, shape index: {}]
  %s2 = inlined_call_operand.vmem [shape: f32[2,512,16], index: 2, kind: input, shape index: {}]
  %s3 = inlined_call_operand.hbm [shape: f32[2,16], index: 3, kind: output, shape index: {}]
  %s4 = sld [smem:[#allocation0]]
  $region30: #{tpu_custom_call.1} parent=0
    _
  %s6 = ssub.s32 1, %s4
  %s7 = scalar_select 0, %s6, %s4
  $region1: #{tpu_custom_call.1} parent=0
    #allocation3 [shape = 'u8[1024]{0}', space=vmem, size = 0x400, scoped, tag = 'output window, operand 0, single buffered']
    #allocation4 [shape = 's32[1]{0}', space=sflag, size = 0x4, scoped, tag = 'scoped memory for tpu_custom_call.1']
    %8 = vsyncpa [#allocation4], 0
    // Predicated region
    $region2: #{tpu_custom_call.1} parent=1 // pred_check
      _
    $region3: #{tpu_custom_call.1} parent=1 // pred_check_branch
      %10 = sbr.rel (0) target = $region5
    $region4: #{tpu_custom_call.1} parent=1 // pred_region
      _
    $region5: #{tpu_custom_call.1} parent=1 // pred_fallthru
      _
    // Predicated region
    $region6: #{tpu_custom_call.1} parent=1 // pred_check
      _
    $region7: #{tpu_custom_call.1} parent=1 // pred_check_branch
      %12 = sbr.rel (0) target = $region9
    $region8: #{tpu_custom_call.1} parent=1 // pred_region
      _
    $region9: #{tpu_custom_call.1} parent=1 // pred_fallthru
      _
    // Predicated region
    $region10: #{tpu_custom_call.1} parent=1 // pred_check
      _
    $region11: #{tpu_custom_call.1} parent=1 // pred_check_branch
      %14 = sbr.rel (0) target = $region13
    $region12: #{tpu_custom_call.1} parent=1 // pred_region
      _
    $region13: #{tpu_custom_call.1} parent=1 // pred_fallthru
      _
    %p15 = scmp.eq.s32.totalorder 0, 0
    // Predicated region
    $region14: #{tpu_custom_call.1} parent=1 // pred_check
      %p16 = pneg %p15
    $region15: #{tpu_custom_call.1} parent=1 // pred_check_branch
      %18 = sbr.rel (%p16) target = $region17
    $region16: #{tpu_custom_call.1} parent=1 // pred_region
      %vm19 = vcmask 123904
      %20 = vst.msk [vmem:[#allocation2] sm:$0x3] %vm19, 0.0
    $region17: #{tpu_custom_call.1} parent=1 // pred_fallthru
      _
    %v21 = vld [vmem:[%s0] sm:$0xff]
    %v22 = vld [vmem:[%s0 + $0x8] sm:$0xff]
    %v23 = vld [vmem:[%s0 + $0x10] sm:$0xff]
    %v24 = vld [vmem:[%s0 + $0x18] sm:$0xff]
    %v25 = vld [vmem:[%s0 + $0x20] sm:$0xff]
    %v26 = vld [vmem:[%s0 + $0x28] sm:$0xff]
    %v27 = vld [vmem:[%s0 + $0x30] sm:$0xff]
    %v28 = vld [vmem:[%s0 + $0x38] sm:$0xff]
    %v29 = vld [vmem:[%s1] sm:$0xff]
    %v30 = vld [vmem:[%s1 + $0x8] sm:$0xff]
    %v31 = vld [vmem:[%s1 + $0x10] sm:$0xff]
    %v32 = vld [vmem:[%s1 + $0x18] sm:$0xff]
    %v33 = vld [vmem:[%s1 + $0x20] sm:$0xff]
    %v34 = vld [vmem:[%s1 + $0x28] sm:$0xff]
    %v35 = vld [vmem:[%s1 + $0x30] sm:$0xff]
    %v36 = vld [vmem:[%s1 + $0x38] sm:$0xff]
    %v37 = vld [vmem:[%s1 + $0x40] sm:$0xff]
    %v38 = vld [vmem:[%s1 + $0x48] sm:$0xff]
    %v39 = vld [vmem:[%s1 + $0x50] sm:$0xff]
    %v40 = vld [vmem:[%s1 + $0x58] sm:$0xff]
    %v41 = vld [vmem:[%s1 + $0x60] sm:$0xff]
    %v42 = vld [vmem:[%s1 + $0x68] sm:$0xff]
    %v43 = vld [vmem:[%s1 + $0x70] sm:$0xff]
    %v44 = vld [vmem:[%s1 + $0x78] sm:$0xff]
    %v45 = vld [vmem:[%s1 + $0x80] sm:$0xff]
    %v46 = vld [vmem:[%s1 + $0x88] sm:$0xff]
    %v47 = vld [vmem:[%s1 + $0x90] sm:$0xff]
    %v48 = vld [vmem:[%s1 + $0x98] sm:$0xff]
    %v49 = vld [vmem:[%s1 + $0xa0] sm:$0xff]
    %v50 = vld [vmem:[%s1 + $0xa8] sm:$0xff]
    %v51 = vld [vmem:[%s1 + $0xb0] sm:$0xff]
    %v52 = vld [vmem:[%s1 + $0xb8] sm:$0xff]
    %v53 = vld [vmem:[%s1 + $0xc0] sm:$0xff]
    %v54 = vld [vmem:[%s1 + $0xc8] sm:$0xff]
    %v55 = vld [vmem:[%s1 + $0xd0] sm:$0xff]
    %v56 = vld [vmem:[%s1 + $0xd8] sm:$0xff]
    %v57 = vld [vmem:[%s1 + $0xe0] sm:$0xff]
    %v58 = vld [vmem:[%s1 + $0xe8] sm:$0xff]
    %v59 = vld [vmem:[%s1 + $0xf0] sm:$0xff]
    %v60 = vld [vmem:[%s1 + $0xf8] sm:$0xff]
    %v61 = vld [vmem:[%s1 + $0x100] sm:$0xff]
    %v62 = vld [vmem:[%s1 + $0x108] sm:$0xff]
    %v63 = vld [vmem:[%s1 + $0x110] sm:$0xff]
    %v64 = vld [vmem:[%s1 + $0x118] sm:$0xff]
    %v65 = vld [vmem:[%s1 + $0x120] sm:$0xff]
    %v66 = vld [vmem:[%s1 + $0x128] sm:$0xff]
    %v67 = vld [vmem:[%s1 + $0x130] sm:$0xff]
    %v68 = vld [vmem:[%s1 + $0x138] sm:$0xff]
    %v69 = vld [vmem:[%s1 + $0x140] sm:$0xff]
    %v70 = vld [vmem:[%s1 + $0x148] sm:$0xff]
    %v71 = vld [vmem:[%s1 + $0x150] sm:$0xff]
    %v72 = vld [vmem:[%s1 + $0x158] sm:$0xff]
    %v73 = vld [vmem:[%s1 + $0x160] sm:$0xff]
    %v74 = vld [vmem:[%s1 + $0x168] sm:$0xff]
    %v75 = vld [vmem:[%s1 + $0x170] sm:$0xff]
    %v76 = vld [vmem:[%s1 + $0x178] sm:$0xff]
    %v77 = vld [vmem:[%s1 + $0x180] sm:$0xff]
    %v78 = vld [vmem:[%s1 + $0x188] sm:$0xff]
    %v79 = vld [vmem:[%s1 + $0x190] sm:$0xff]
    %v80 = vld [vmem:[%s1 + $0x198] sm:$0xff]
    %v81 = vld [vmem:[%s1 + $0x1a0] sm:$0xff]
    %v82 = vld [vmem:[%s1 + $0x1a8] sm:$0xff]
    %v83 = vld [vmem:[%s1 + $0x1b0] sm:$0xff]
    %v84 = vld [vmem:[%s1 + $0x1b8] sm:$0xff]
    %v85 = vld [vmem:[%s1 + $0x1c0] sm:$0xff]
    %v86 = vld [vmem:[%s1 + $0x1c8] sm:$0xff]
    %v87 = vld [vmem:[%s1 + $0x1d0] sm:$0xff]
    %v88 = vld [vmem:[%s1 + $0x1d8] sm:$0xff]
    %v89 = vld [vmem:[%s1 + $0x1e0] sm:$0xff]
    %v90 = vld [vmem:[%s1 + $0x1e8] sm:$0xff]
    %v91 = vld [vmem:[%s1 + $0x1f0] sm:$0xff]
    %v92 = vld [vmem:[%s1 + $0x1f8] sm:$0xff]
    %v93 = vld [vmem:[%s1 + $0x200] sm:$0xff]
    %v94 = vld [vmem:[%s1 + $0x208] sm:$0xff]
    %v95 = vld [vmem:[%s1 + $0x210] sm:$0xff]
    %v96 = vld [vmem:[%s1 + $0x218] sm:$0xff]
    %v97 = vld [vmem:[%s1 + $0x220] sm:$0xff]
    %v98 = vld [vmem:[%s1 + $0x228] sm:$0xff]
    %v99 = vld [vmem:[%s1 + $0x230] sm:$0xff]
    %v100 = vld [vmem:[%s1 + $0x238] sm:$0xff]
    %v101 = vld [vmem:[%s1 + $0x240] sm:$0xff]
    %v102 = vld [vmem:[%s1 + $0x248] sm:$0xff]
    %v103 = vld [vmem:[%s1 + $0x250] sm:$0xff]
    %v104 = vld [vmem:[%s1 + $0x258] sm:$0xff]
    %v105 = vld [vmem:[%s1 + $0x260] sm:$0xff]
    %v106 = vld [vmem:[%s1 + $0x268] sm:$0xff]
    %v107 = vld [vmem:[%s1 + $0x270] sm:$0xff]
    %v108 = vld [vmem:[%s1 + $0x278] sm:$0xff]
    %v109 = vld [vmem:[%s1 + $0x280] sm:$0xff]
    %v110 = vld [vmem:[%s1 + $0x288] sm:$0xff]
    %v111 = vld [vmem:[%s1 + $0x290] sm:$0xff]
    %v112 = vld [vmem:[%s1 + $0x298] sm:$0xff]
    %v113 = vld [vmem:[%s1 + $0x2a0] sm:$0xff]
    %v114 = vld [vmem:[%s1 + $0x2a8] sm:$0xff]
    %v115 = vld [vmem:[%s1 + $0x2b0] sm:$0xff]
    %v116 = vld [vmem:[%s1 + $0x2b8] sm:$0xff]
    %v117 = vld [vmem:[%s1 + $0x2c0] sm:$0xff]
    %v118 = vld [vmem:[%s1 + $0x2c8] sm:$0xff]
    %v119 = vld [vmem:[%s1 + $0x2d0] sm:$0xff]
    %v120 = vld [vmem:[%s1 + $0x2d8] sm:$0xff]
    %v121 = vld [vmem:[%s1 + $0x2e0] sm:$0xff]
    %v122 = vld [vmem:[%s1 + $0x2e8] sm:$0xff]
    %v123 = vld [vmem:[%s1 + $0x2f0] sm:$0xff]
    %v124 = vld [vmem:[%s1 + $0x2f8] sm:$0xff]
    %v125 = vld [vmem:[%s1 + $0x300] sm:$0xff]
    %v126 = vld [vmem:[%s1 + $0x308] sm:$0xff]
    %v127 = vld [vmem:[%s1 + $0x310] sm:$0xff]
    %v128 = vld [vmem:[%s1 + $0x318] sm:$0xff]
    %v129 = vld [vmem:[%s1 + $0x320] sm:$0xff]
    %v130 = vld [vmem:[%s1 + $0x328] sm:$0xff]
    %v131 = vld [vmem:[%s1 + $0x330] sm:$0xff]
    %v132 = vld [vmem:[%s1 + $0x338] sm:$0xff]
    %v133 = vld [vmem:[%s1 + $0x340] sm:$0xff]
    %v134 = vld [vmem:[%s1 + $0x348] sm:$0xff]
    %v135 = vld [vmem:[%s1 + $0x350] sm:$0xff]
    %v136 = vld [vmem:[%s1 + $0x358] sm:$0xff]
    %v137 = vld [vmem:[%s1 + $0x360] sm:$0xff]
    %v138 = vld [vmem:[%s1 + $0x368] sm:$0xff]
    %v139 = vld [vmem:[%s1 + $0x370] sm:$0xff]
    %v140 = vld [vmem:[%s1 + $0x378] sm:$0xff]
    %v141 = vld [vmem:[%s1 + $0x380] sm:$0xff]
    %v142 = vld [vmem:[%s1 + $0x388] sm:$0xff]
    %v143 = vld [vmem:[%s1 + $0x390] sm:$0xff]
    %v144 = vld [vmem:[%s1 + $0x398] sm:$0xff]
    %v145 = vld [vmem:[%s1 + $0x3a0] sm:$0xff]
    %v146 = vld [vmem:[%s1 + $0x3a8] sm:$0xff]
    %v147 = vld [vmem:[%s1 + $0x3b0] sm:$0xff]
    %v148 = vld [vmem:[%s1 + $0x3b8] sm:$0xff]
    %v149 = vld [vmem:[%s1 + $0x3c0] sm:$0xff]
    %v150 = vld [vmem:[%s1 + $0x3c8] sm:$0xff]
    %v151 = vld [vmem:[%s1 + $0x3d0] sm:$0xff]
    %v152 = vld [vmem:[%s1 + $0x3d8] sm:$0xff]
    %v153 = vld [vmem:[%s1 + $0x3e0] sm:$0xff]
    %v154 = vld [vmem:[%s1 + $0x3e8] sm:$0xff]
    %v155 = vld [vmem:[%s1 + $0x3f0] sm:$0xff]
    %v156 = vld [vmem:[%s1 + $0x3f8] sm:$0xff]
    %157 = vmatpush.msra.mxu0 %v44
    %158 = vmatpush.msra.mxu0 %v43
    %159 = vmatpush.msra.mxu0 %v42
    %160 = vmatpush.msra.mxu0 %v41
    %161 = vmatpush.msra.mxu0 %v40
    %162 = vmatpush.msra.mxu0 %v39
    %163 = vmatpush.msra.mxu0 %v38
    %164 = vmatpush.msra.mxu0 %v37
    %165 = vmatpush.msra.mxu0 %v36
    %166 = vmatpush.msra.mxu0 %v35
    %167 = vmatpush.msra.mxu0 %v34
    %168 = vmatpush.msra.mxu0 %v33
    %169 = vmatpush.msra.mxu0 %v32
    %170 = vmatpush.msra.mxu0 %v31
    %171 = vmatpush.msra.mxu0 %v30
    %172 = vmatpush.msra.mxu0 %v29
    %173 = vmatmul.f32.gmra.mxu0 %v21
    %v174 = vpop.f32.mrf.mxu0
    %v175 = vadd.f32 0.0, %v174
    %176 = vmatmul.f32.gmra.mxu0 %v25
    %v177 = vpop.f32.mrf.mxu0
    %v178 = vadd.f32 0.0, %v177
    %179 = vdwg.mxu0
    %180 = vmatpush.msra.mxu0 %v60
    %181 = vmatpush.msra.mxu0 %v59
    %182 = vmatpush.msra.mxu0 %v58
    %183 = vmatpush.msra.mxu0 %v57
    %184 = vmatpush.msra.mxu0 %v56
    %185 = vmatpush.msra.mxu0 %v55
    %186 = vmatpush.msra.mxu0 %v54
    %187 = vmatpush.msra.mxu0 %v53
    %188 = vmatpush.msra.mxu0 %v52
    %189 = vmatpush.msra.mxu0 %v51
    %190 = vmatpush.msra.mxu0 %v50
    %191 = vmatpush.msra.mxu0 %v49
    %192 = vmatpush.msra.mxu0 %v48
    %193 = vmatpush.msra.mxu0 %v47
    %194 = vmatpush.msra.mxu0 %v46
    %195 = vmatpush.msra.mxu0 %v45
    %196 = vmatmul.f32.gmra.mxu0 %v22
    %v197 = vpop.f32.mrf.mxu0
    %v198 = vadd.f32 %v175, %v197
    %199 = vmatmul.f32.gmra.mxu0 %v26
    %v200 = vpop.f32.mrf.mxu0
    %v201 = vadd.f32 %v178, %v200
    %202 = vdwg.mxu0
    %203 = vmatpush.msra.mxu0 %v76
    %204 = vmatpush.msra.mxu0 %v75
    %205 = vmatpush.msra.mxu0 %v74
    %206 = vmatpush.msra.mxu0 %v73
    %207 = vmatpush.msra.mxu0 %v72
    %208 = vmatpush.msra.mxu0 %v71
    %209 = vmatpush.msra.mxu0 %v70
    %210 = vmatpush.msra.mxu0 %v69
    %211 = vmatpush.msra.mxu0 %v68
    %212 = vmatpush.msra.mxu0 %v67
    %213 = vmatpush.msra.mxu0 %v66
    %214 = vmatpush.msra.mxu0 %v65
    %215 = vmatpush.msra.mxu0 %v64
    %216 = vmatpush.msra.mxu0 %v63
    %217 = vmatpush.msra.mxu0 %v62
    %218 = vmatpush.msra.mxu0 %v61
    %219 = vmatmul.f32.gmra.mxu0 %v23
    %v220 = vpop.f32.mrf.mxu0
    %v221 = vadd.f32 %v198, %v220
    %222 = vmatmul.f32.gmra.mxu0 %v27
    %v223 = vpop.f32.mrf.mxu0
    %v224 = vadd.f32 %v201, %v223
    %225 = vdwg.mxu0
    %226 = vmatpush.msra.mxu0 %v92
    %227 = vmatpush.msra.mxu0 %v91
    %228 = vmatpush.msra.mxu0 %v90
    %229 = vmatpush.msra.mxu0 %v89
    %230 = vmatpush.msra.mxu0 %v88
    %231 = vmatpush.msra.mxu0 %v87
    %232 = vmatpush.msra.mxu0 %v86
    %233 = vmatpush.msra.mxu0 %v85
    %234 = vmatpush.msra.mxu0 %v84
    %235 = vmatpush.msra.mxu0 %v83
    %236 = vmatpush.msra.mxu0 %v82
    %237 = vmatpush.msra.mxu0 %v81
    %238 = vmatpush.msra.mxu0 %v80
    %239 = vmatpush.msra.mxu0 %v79
    %240 = vmatpush.msra.mxu0 %v78
    %241 = vmatpush.msra.mxu0 %v77
    %242 = vmatmul.f32.gmra.mxu0 %v24
    %v243 = vpop.f32.mrf.mxu0
    %v244 = vadd.f32 %v221, %v243
    %245 = vmatmul.f32.gmra.mxu0 %v28
    %v246 = vpop.f32.mrf.mxu0
    %v247 = vadd.f32 %v224, %v246
    %248 = vdwg.mxu0
    %249 = vmatpush.msra.mxu0 %v108
    %250 = vmatpush.msra.mxu0 %v107
    %251 = vmatpush.msra.mxu0 %v106
    %252 = vmatpush.msra.mxu0 %v105
    %253 = vmatpush.msra.mxu0 %v104
    %254 = vmatpush.msra.mxu0 %v103
    %255 = vmatpush.msra.mxu0 %v102
    %256 = vmatpush.msra.mxu0 %v101
    %257 = vmatpush.msra.mxu0 %v100
    %258 = vmatpush.msra.mxu0 %v99
    %259 = vmatpush.msra.mxu0 %v98
    %260 = vmatpush.msra.mxu0 %v97
    %261 = vmatpush.msra.mxu0 %v96
    %262 = vmatpush.msra.mxu0 %v95
    %263 = vmatpush.msra.mxu0 %v94
    %264 = vmatpush.msra.mxu0 %v93
    %265 = vmatmul.f32.gmra.mxu0 %v21
    %v266 = vpop.f32.mrf.mxu0
    %v267 = vadd.f32 0.0, %v266
    %268 = vmatmul.f32.gmra.mxu0 %v25
    %v269 = vpop.f32.mrf.mxu0
    %v270 = vadd.f32 0.0, %v269
    %271 = vdwg.mxu0
    %272 = vmatpush.msra.mxu0 %v124
    %273 = vmatpush.msra.mxu0 %v123
    %274 = vmatpush.msra.mxu0 %v122
    %275 = vmatpush.msra.mxu0 %v121
    %276 = vmatpush.msra.mxu0 %v120
    %277 = vmatpush.msra.mxu0 %v119
    %278 = vmatpush.msra.mxu0 %v118
    %279 = vmatpush.msra.mxu0 %v117
    %280 = vmatpush.msra.mxu0 %v116
    %281 = vmatpush.msra.mxu0 %v115
    %282 = vmatpush.msra.mxu0 %v114
    %283 = vmatpush.msra.mxu0 %v113
    %284 = vmatpush.msra.mxu0 %v112
    %285 = vmatpush.msra.mxu0 %v111
    %286 = vmatpush.msra.mxu0 %v110
    %287 = vmatpush.msra.mxu0 %v109
    %288 = vmatmul.f32.gmra.mxu0 %v22
    %v289 = vpop.f32.mrf.mxu0
    %v290 = vadd.f32 %v267, %v289
    %291 = vmatmul.f32.gmra.mxu0 %v26
    %v292 = vpop.f32.mrf.mxu0
    %v293 = vadd.f32 %v270, %v292
    %294 = vdwg.mxu0
    %295 = vmatpush.msra.mxu0 %v140
    %296 = vmatpush.msra.mxu0 %v139
    %297 = vmatpush.msra.mxu0 %v138
    %298 = vmatpush.msra.mxu0 %v137
    %299 = vmatpush.msra.mxu0 %v136
    %300 = vmatpush.msra.mxu0 %v135
    %301 = vmatpush.msra.mxu0 %v134
    %302 = vmatpush.msra.mxu0 %v133
    %303 = vmatpush.msra.mxu0 %v132
    %304 = vmatpush.msra.mxu0 %v131
    %305 = vmatpush.msra.mxu0 %v130
    %306 = vmatpush.msra.mxu0 %v129
    %307 = vmatpush.msra.mxu0 %v128
    %308 = vmatpush.msra.mxu0 %v127
    %309 = vmatpush.msra.mxu0 %v126
    %310 = vmatpush.msra.mxu0 %v125
    %311 = vmatmul.f32.gmra.mxu0 %v23
    %v312 = vpop.f32.mrf.mxu0
    %v313 = vadd.f32 %v290, %v312
    %314 = vmatmul.f32.gmra.mxu0 %v27
    %v315 = vpop.f32.mrf.mxu0
    %v316 = vadd.f32 %v293, %v315
    %317 = vdwg.mxu0
    %318 = vmatpush.msra.mxu0 %v156
    %319 = vmatpush.msra.mxu0 %v155
    %320 = vmatpush.msra.mxu0 %v154
    %321 = vmatpush.msra.mxu0 %v153
    %322 = vmatpush.msra.mxu0 %v152
    %323 = vmatpush.msra.mxu0 %v151
    %324 = vmatpush.msra.mxu0 %v150
    %325 = vmatpush.msra.mxu0 %v149
    %326 = vmatpush.msra.mxu0 %v148
    %327 = vmatpush.msra.mxu0 %v147
    %328 = vmatpush.msra.mxu0 %v146
    %329 = vmatpush.msra.mxu0 %v145
    %330 = vmatpush.msra.mxu0 %v144
    %331 = vmatpush.msra.mxu0 %v143
    %332 = vmatpush.msra.mxu0 %v142
    %333 = vmatpush.msra.mxu0 %v141
    %334 = vmatmul.f32.gmra.mxu0 %v24
    %v335 = vpop.f32.mrf.mxu0
    %v336 = vadd.f32 %v313, %v335
    %337 = vmatmul.f32.gmra.mxu0 %v28
    %v338 = vpop.f32.mrf.mxu0
    %v339 = vadd.f32 %v316, %v338
    %340 = vdwg.mxu0
    %v341 = vld [vmem:[%s2] sm:$0xff]
    %v342 = vld [vmem:[%s2 + $0x8] sm:$0xff]
    %v343 = vld [vmem:[%s2 + $0x10] sm:$0xff]
    %v344 = vld [vmem:[%s2 + $0x18] sm:$0xff]
    %v345 = vld [vmem:[%s2 + $0x20] sm:$0xff]
    %v346 = vld [vmem:[%s2 + $0x28] sm:$0xff]
    %v347 = vld [vmem:[%s2 + $0x30] sm:$0xff]
    %v348 = vld [vmem:[%s2 + $0x38] sm:$0xff]
    %v349 = vld [vmem:[%s2 + $0x40] sm:$0xff]
    %v350 = vld [vmem:[%s2 + $0x48] sm:$0xff]
    %v351 = vld [vmem:[%s2 + $0x50] sm:$0xff]
    %v352 = vld [vmem:[%s2 + $0x58] sm:$0xff]
    %v353 = vld [vmem:[%s2 + $0x60] sm:$0xff]
    %v354 = vld [vmem:[%s2 + $0x68] sm:$0xff]
    %v355 = vld [vmem:[%s2 + $0x70] sm:$0xff]
    %v356 = vld [vmem:[%s2 + $0x78] sm:$0xff]
    %v357 = vld [vmem:[%s2 + $0x80] sm:$0xff]
    %v358 = vld [vmem:[%s2 + $0x88] sm:$0xff]
    %v359 = vld [vmem:[%s2 + $0x90] sm:$0xff]
    %v360 = vld [vmem:[%s2 + $0x98] sm:$0xff]
    %v361 = vld [vmem:[%s2 + $0xa0] sm:$0xff]
    %v362 = vld [vmem:[%s2 + $0xa8] sm:$0xff]
    %v363 = vld [vmem:[%s2 + $0xb0] sm:$0xff]
    %v364 = vld [vmem:[%s2 + $0xb8] sm:$0xff]
    %v365 = vld [vmem:[%s2 + $0xc0] sm:$0xff]
    %v366 = vld [vmem:[%s2 + $0xc8] sm:$0xff]
    %v367 = vld [vmem:[%s2 + $0xd0] sm:$0xff]
    %v368 = vld [vmem:[%s2 + $0xd8] sm:$0xff]
    %v369 = vld [vmem:[%s2 + $0xe0] sm:$0xff]
    %v370 = vld [vmem:[%s2 + $0xe8] sm:$0xff]
    %v371 = vld [vmem:[%s2 + $0xf0] sm:$0xff]
    %v372 = vld [vmem:[%s2 + $0xf8] sm:$0xff]
    %v373 = vld [vmem:[%s2 + $0x100] sm:$0xff]
    %v374 = vld [vmem:[%s2 + $0x108] sm:$0xff]
    %v375 = vld [vmem:[%s2 + $0x110] sm:$0xff]
    %v376 = vld [vmem:[%s2 + $0x118] sm:$0xff]
    %v377 = vld [vmem:[%s2 + $0x120] sm:$0xff]
    %v378 = vld [vmem:[%s2 + $0x128] sm:$0xff]
    %v379 = vld [vmem:[%s2 + $0x130] sm:$0xff]
    %v380 = vld [vmem:[%s2 + $0x138] sm:$0xff]
    %v381 = vld [vmem:[%s2 + $0x140] sm:$0xff]
    %v382 = vld [vmem:[%s2 + $0x148] sm:$0xff]
    %v383 = vld [vmem:[%s2 + $0x150] sm:$0xff]
    %v384 = vld [vmem:[%s2 + $0x158] sm:$0xff]
    %v385 = vld [vmem:[%s2 + $0x160] sm:$0xff]
    %v386 = vld [vmem:[%s2 + $0x168] sm:$0xff]
    %v387 = vld [vmem:[%s2 + $0x170] sm:$0xff]
    %v388 = vld [vmem:[%s2 + $0x178] sm:$0xff]
    %v389 = vld [vmem:[%s2 + $0x180] sm:$0xff]
    %v390 = vld [vmem:[%s2 + $0x188] sm:$0xff]
    %v391 = vld [vmem:[%s2 + $0x190] sm:$0xff]
    %v392 = vld [vmem:[%s2 + $0x198] sm:$0xff]
    %v393 = vld [vmem:[%s2 + $0x1a0] sm:$0xff]
    %v394 = vld [vmem:[%s2 + $0x1a8] sm:$0xff]
    %v395 = vld [vmem:[%s2 + $0x1b0] sm:$0xff]
    %v396 = vld [vmem:[%s2 + $0x1b8] sm:$0xff]
    %v397 = vld [vmem:[%s2 + $0x1c0] sm:$0xff]
    %v398 = vld [vmem:[%s2 + $0x1c8] sm:$0xff]
    %v399 = vld [vmem:[%s2 + $0x1d0] sm:$0xff]
    %v400 = vld [vmem:[%s2 + $0x1d8] sm:$0xff]
    %v401 = vld [vmem:[%s2 + $0x1e0] sm:$0xff]
    %v402 = vld [vmem:[%s2 + $0x1e8] sm:$0xff]
    %v403 = vld [vmem:[%s2 + $0x1f0] sm:$0xff]
    %v404 = vld [vmem:[%s2 + $0x1f8] sm:$0xff]
    %v405 = vld [vmem:[%s2 + $0x200] sm:$0xff]
    %v406 = vld [vmem:[%s2 + $0x208] sm:$0xff]
    %v407 = vld [vmem:[%s2 + $0x210] sm:$0xff]
    %v408 = vld [vmem:[%s2 + $0x218] sm:$0xff]
    %v409 = vld [vmem:[%s2 + $0x220] sm:$0xff]
    %v410 = vld [vmem:[%s2 + $0x228] sm:$0xff]
    %v411 = vld [vmem:[%s2 + $0x230] sm:$0xff]
    %v412 = vld [vmem:[%s2 + $0x238] sm:$0xff]
    %v413 = vld [vmem:[%s2 + $0x240] sm:$0xff]
    %v414 = vld [vmem:[%s2 + $0x248] sm:$0xff]
    %v415 = vld [vmem:[%s2 + $0x250] sm:$0xff]
    %v416 = vld [vmem:[%s2 + $0x258] sm:$0xff]
    %v417 = vld [vmem:[%s2 + $0x260] sm:$0xff]
    %v418 = vld [vmem:[%s2 + $0x268] sm:$0xff]
    %v419 = vld [vmem:[%s2 + $0x270] sm:$0xff]
    %v420 = vld [vmem:[%s2 + $0x278] sm:$0xff]
    %v421 = vld [vmem:[%s2 + $0x280] sm:$0xff]
    %v422 = vld [vmem:[%s2 + $0x288] sm:$0xff]
    %v423 = vld [vmem:[%s2 + $0x290] sm:$0xff]
    %v424 = vld [vmem:[%s2 + $0x298] sm:$0xff]
    %v425 = vld [vmem:[%s2 + $0x2a0] sm:$0xff]
    %v426 = vld [vmem:[%s2 + $0x2a8] sm:$0xff]
    %v427 = vld [vmem:[%s2 + $0x2b0] sm:$0xff]
    %v428 = vld [vmem:[%s2 + $0x2b8] sm:$0xff]
    %v429 = vld [vmem:[%s2 + $0x2c0] sm:$0xff]
    %v430 = vld [vmem:[%s2 + $0x2c8] sm:$0xff]
    %v431 = vld [vmem:[%s2 + $0x2d0] sm:$0xff]
    %v432 = vld [vmem:[%s2 + $0x2d8] sm:$0xff]
    %v433 = vld [vmem:[%s2 + $0x2e0] sm:$0xff]
    %v434 = vld [vmem:[%s2 + $0x2e8] sm:$0xff]
    %v435 = vld [vmem:[%s2 + $0x2f0] sm:$0xff]
    %v436 = vld [vmem:[%s2 + $0x2f8] sm:$0xff]
    %v437 = vld [vmem:[%s2 + $0x300] sm:$0xff]
    %v438 = vld [vmem:[%s2 + $0x308] sm:$0xff]
    %v439 = vld [vmem:[%s2 + $0x310] sm:$0xff]
    %v440 = vld [vmem:[%s2 + $0x318] sm:$0xff]
    %v441 = vld [vmem:[%s2 + $0x320] sm:$0xff]
    %v442 = vld [vmem:[%s2 + $0x328] sm:$0xff]
    %v443 = vld [vmem:[%s2 + $0x330] sm:$0xff]
    %v444 = vld [vmem:[%s2 + $0x338] sm:$0xff]
    %v445 = vld [vmem:[%s2 + $0x340] sm:$0xff]
    %v446 = vld [vmem:[%s2 + $0x348] sm:$0xff]
    %v447 = vld [vmem:[%s2 + $0x350] sm:$0xff]
    %v448 = vld [vmem:[%s2 + $0x358] sm:$0xff]
    %v449 = vld [vmem:[%s2 + $0x360] sm:$0xff]
    %v450 = vld [vmem:[%s2 + $0x368] sm:$0xff]
    %v451 = vld [vmem:[%s2 + $0x370] sm:$0xff]
    %v452 = vld [vmem:[%s2 + $0x378] sm:$0xff]
    %v453 = vld [vmem:[%s2 + $0x380] sm:$0xff]
    %v454 = vld [vmem:[%s2 + $0x388] sm:$0xff]
    %v455 = vld [vmem:[%s2 + $0x390] sm:$0xff]
    %v456 = vld [vmem:[%s2 + $0x398] sm:$0xff]
    %v457 = vld [vmem:[%s2 + $0x3a0] sm:$0xff]
    %v458 = vld [vmem:[%s2 + $0x3a8] sm:$0xff]
    %v459 = vld [vmem:[%s2 + $0x3b0] sm:$0xff]
    %v460 = vld [vmem:[%s2 + $0x3b8] sm:$0xff]
    %v461 = vld [vmem:[%s2 + $0x3c0] sm:$0xff]
    %v462 = vld [vmem:[%s2 + $0x3c8] sm:$0xff]
    %v463 = vld [vmem:[%s2 + $0x3d0] sm:$0xff]
    %v464 = vld [vmem:[%s2 + $0x3d8] sm:$0xff]
    %v465 = vld [vmem:[%s2 + $0x3e0] sm:$0xff]
    %v466 = vld [vmem:[%s2 + $0x3e8] sm:$0xff]
    %v467 = vld [vmem:[%s2 + $0x3f0] sm:$0xff]
    %v468 = vld [vmem:[%s2 + $0x3f8] sm:$0xff]
    %469 = vmatpush.msra.mxu0 %v356
    %470 = vmatpush.msra.mxu0 %v355
    %471 = vmatpush.msra.mxu0 %v354
    %472 = vmatpush.msra.mxu0 %v353
    %473 = vmatpush.msra.mxu0 %v352
    %474 = vmatpush.msra.mxu0 %v351
    %475 = vmatpush.msra.mxu0 %v350
    %476 = vmatpush.msra.mxu0 %v349
    %477 = vmatpush.msra.mxu0 %v348
    %478 = vmatpush.msra.mxu0 %v347
    %479 = vmatpush.msra.mxu0 %v346
    %480 = vmatpush.msra.mxu0 %v345
    %481 = vmatpush.msra.mxu0 %v344
    %482 = vmatpush.msra.mxu0 %v343
    %483 = vmatpush.msra.mxu0 %v342
    %484 = vmatpush.msra.mxu0 %v341
    %485 = vmatmul.f32.gmra.mxu0 %v21
    %v486 = vpop.f32.mrf.mxu0
    %v487 = vadd.f32 0.0, %v486
    %488 = vmatmul.f32.gmra.mxu0 %v25
    %v489 = vpop.f32.mrf.mxu0
    %v490 = vadd.f32 0.0, %v489
    %491 = vdwg.mxu0
    %492 = vmatpush.msra.mxu0 %v372
    %493 = vmatpush.msra.mxu0 %v371
    %494 = vmatpush.msra.mxu0 %v370
    %495 = vmatpush.msra.mxu0 %v369
    %496 = vmatpush.msra.mxu0 %v368
    %497 = vmatpush.msra.mxu0 %v367
    %498 = vmatpush.msra.mxu0 %v366
    %499 = vmatpush.msra.mxu0 %v365
    %500 = vmatpush.msra.mxu0 %v364
    %501 = vmatpush.msra.mxu0 %v363
    %502 = vmatpush.msra.mxu0 %v362
    %503 = vmatpush.msra.mxu0 %v361
    %504 = vmatpush.msra.mxu0 %v360
    %505 = vmatpush.msra.mxu0 %v359
    %506 = vmatpush.msra.mxu0 %v358
    %507 = vmatpush.msra.mxu0 %v357
    %508 = vmatmul.f32.gmra.mxu0 %v22
    %v509 = vpop.f32.mrf.mxu0
    %v510 = vadd.f32 %v487, %v509
    %511 = vmatmul.f32.gmra.mxu0 %v26
    %v512 = vpop.f32.mrf.mxu0
    %v513 = vadd.f32 %v490, %v512
    %514 = vdwg.mxu0
    %515 = vmatpush.msra.mxu0 %v388
    %516 = vmatpush.msra.mxu0 %v387
    %517 = vmatpush.msra.mxu0 %v386
    %518 = vmatpush.msra.mxu0 %v385
    %519 = vmatpush.msra.mxu0 %v384
    %520 = vmatpush.msra.mxu0 %v383
    %521 = vmatpush.msra.mxu0 %v382
    %522 = vmatpush.msra.mxu0 %v381
    %523 = vmatpush.msra.mxu0 %v380
    %524 = vmatpush.msra.mxu0 %v379
    %525 = vmatpush.msra.mxu0 %v378
    %526 = vmatpush.msra.mxu0 %v377
    %527 = vmatpush.msra.mxu0 %v376
    %528 = vmatpush.msra.mxu0 %v375
    %529 = vmatpush.msra.mxu0 %v374
    %530 = vmatpush.msra.mxu0 %v373
    %531 = vmatmul.f32.gmra.mxu0 %v23
    %v532 = vpop.f32.mrf.mxu0
    %v533 = vadd.f32 %v510, %v532
    %534 = vmatmul.f32.gmra.mxu0 %v27
    %v535 = vpop.f32.mrf.mxu0
    %v536 = vadd.f32 %v513, %v535
    %537 = vdwg.mxu0
    %538 = vmatpush.msra.mxu0 %v404
    %539 = vmatpush.msra.mxu0 %v403
    %540 = vmatpush.msra.mxu0 %v402
    %541 = vmatpush.msra.mxu0 %v401
    %542 = vmatpush.msra.mxu0 %v400
    %543 = vmatpush.msra.mxu0 %v399
    %544 = vmatpush.msra.mxu0 %v398
    %545 = vmatpush.msra.mxu0 %v397
    %546 = vmatpush.msra.mxu0 %v396
    %547 = vmatpush.msra.mxu0 %v395
    %548 = vmatpush.msra.mxu0 %v394
    %549 = vmatpush.msra.mxu0 %v393
    %550 = vmatpush.msra.mxu0 %v392
    %551 = vmatpush.msra.mxu0 %v391
    %552 = vmatpush.msra.mxu0 %v390
    %553 = vmatpush.msra.mxu0 %v389
    %554 = vmatmul.f32.gmra.mxu0 %v24
    %v555 = vpop.f32.mrf.mxu0
    %v556 = vadd.f32 %v533, %v555
    %557 = vmatmul.f32.gmra.mxu0 %v28
    %v558 = vpop.f32.mrf.mxu0
    %v559 = vadd.f32 %v536, %v558
    %560 = vdwg.mxu0
    %561 = vmatpush.msra.mxu0 %v420
    %562 = vmatpush.msra.mxu0 %v419
    %563 = vmatpush.msra.mxu0 %v418
    %564 = vmatpush.msra.mxu0 %v417
    %565 = vmatpush.msra.mxu0 %v416
    %566 = vmatpush.msra.mxu0 %v415
    %567 = vmatpush.msra.mxu0 %v414
    %568 = vmatpush.msra.mxu0 %v413
    %569 = vmatpush.msra.mxu0 %v412
    %570 = vmatpush.msra.mxu0 %v411
    %571 = vmatpush.msra.mxu0 %v410
    %572 = vmatpush.msra.mxu0 %v409
    %573 = vmatpush.msra.mxu0 %v408
    %574 = vmatpush.msra.mxu0 %v407
    %575 = vmatpush.msra.mxu0 %v406
    %576 = vmatpush.msra.mxu0 %v405
    %577 = vmatmul.f32.gmra.mxu0 %v21
    %v578 = vpop.f32.mrf.mxu0
    %v579 = vadd.f32 0.0, %v578
    %580 = vmatmul.f32.gmra.mxu0 %v25
    %v581 = vpop.f32.mrf.mxu0
    %v582 = vadd.f32 0.0, %v581
    %583 = vdwg.mxu0
    %584 = vmatpush.msra.mxu0 %v436
    %585 = vmatpush.msra.mxu0 %v435
    %586 = vmatpush.msra.mxu0 %v434
    %587 = vmatpush.msra.mxu0 %v433
    %588 = vmatpush.msra.mxu0 %v432
    %589 = vmatpush.msra.mxu0 %v431
    %590 = vmatpush.msra.mxu0 %v430
    %591 = vmatpush.msra.mxu0 %v429
    %592 = vmatpush.msra.mxu0 %v428
    %593 = vmatpush.msra.mxu0 %v427
    %594 = vmatpush.msra.mxu0 %v426
    %595 = vmatpush.msra.mxu0 %v425
    %596 = vmatpush.msra.mxu0 %v424
    %597 = vmatpush.msra.mxu0 %v423
    %598 = vmatpush.msra.mxu0 %v422
    %599 = vmatpush.msra.mxu0 %v421
    %600 = vmatmul.f32.gmra.mxu0 %v22
    %v601 = vpop.f32.mrf.mxu0
    %v602 = vadd.f32 %v579, %v601
    %603 = vmatmul.f32.gmra.mxu0 %v26
    %v604 = vpop.f32.mrf.mxu0
    %v605 = vadd.f32 %v582, %v604
    %606 = vdwg.mxu0
    %607 = vmatpush.msra.mxu0 %v452
    %608 = vmatpush.msra.mxu0 %v451
    %609 = vmatpush.msra.mxu0 %v450
    %610 = vmatpush.msra.mxu0 %v449
    %611 = vmatpush.msra.mxu0 %v448
    %612 = vmatpush.msra.mxu0 %v447
    %613 = vmatpush.msra.mxu0 %v446
    %614 = vmatpush.msra.mxu0 %v445
    %615 = vmatpush.msra.mxu0 %v444
    %616 = vmatpush.msra.mxu0 %v443
    %617 = vmatpush.msra.mxu0 %v442
    %618 = vmatpush.msra.mxu0 %v441
    %619 = vmatpush.msra.mxu0 %v440
    %620 = vmatpush.msra.mxu0 %v439
    %621 = vmatpush.msra.mxu0 %v438
    %622 = vmatpush.msra.mxu0 %v437
    %623 = vmatmul.f32.gmra.mxu0 %v23
    %v624 = vpop.f32.mrf.mxu0
    %v625 = vadd.f32 %v602, %v624
    %626 = vmatmul.f32.gmra.mxu0 %v27
    %v627 = vpop.f32.mrf.mxu0
    %v628 = vadd.f32 %v605, %v627
    %629 = vdwg.mxu0
    %630 = vmatpush.msra.mxu0 %v468
    %631 = vmatpush.msra.mxu0 %v467
    %632 = vmatpush.msra.mxu0 %v466
    %633 = vmatpush.msra.mxu0 %v465
    %634 = vmatpush.msra.mxu0 %v464
    %635 = vmatpush.msra.mxu0 %v463
    %636 = vmatpush.msra.mxu0 %v462
    %637 = vmatpush.msra.mxu0 %v461
    %638 = vmatpush.msra.mxu0 %v460
    %639 = vmatpush.msra.mxu0 %v459
    %640 = vmatpush.msra.mxu0 %v458
    %641 = vmatpush.msra.mxu0 %v457
    %642 = vmatpush.msra.mxu0 %v456
    %643 = vmatpush.msra.mxu0 %v455
    %644 = vmatpush.msra.mxu0 %v454
    %645 = vmatpush.msra.mxu0 %v453
    %646 = vmatmul.f32.gmra.mxu0 %v24
    %v647 = vpop.f32.mrf.mxu0
    %v648 = vadd.f32 %v625, %v647
    %649 = vmatmul.f32.gmra.mxu0 %v28
    %v650 = vpop.f32.mrf.mxu0
    %v651 = vadd.f32 %v628, %v650
    %652 = vdwg.mxu0
    %v653 = vld [vmem:[#allocation2] sm:$0x3]
    %v654 = vmul.f32 %v244, %v556
    %v655 = vmul.f32 %v247, %v559
    %v656 = vmul.f32 %v336, %v648
    %v657 = vmul.f32 %v339, %v651
    %vm658 = vcmask 130048
    %v659 = vsel %vm658, %v654, 0.0
    %660 = vadd.xlane.f32.xlu0 %v659
    %v661 = vpop.xlane.xlu0 %660
    %v662 = vsel %vm658, %v655, 0.0
    %663 = vadd.xlane.f32.xlu0 %v662
    %v664 = vpop.xlane.xlu0 %663
    %v665 = vsel %vm658, %v656, 0.0
    %666 = vadd.xlane.f32.xlu0 %v665
    %v667 = vpop.xlane.xlu0 %666
    %v668 = vsel %vm658, %v657, 0.0
    %669 = vadd.xlane.f32.xlu0 %v668
    %v670 = vpop.xlane.xlu0 %669
    %v675 = vlaneseq
    %v676 = vand.u32 %v675, 127
    %v677 = vperm.slane %v661, %v676
    %v678 = vadd.s32 %v676, 4294967288
    %v679 = vperm.slane %v664, %v678
    %vm680 = vcmask 130112
    %v681 = vsel %vm680, %v679, %v677
    %v682 = vperm.slane %v667, %v676
    %v683 = vperm.slane %v670, %v678
    %v684 = vsel %vm680, %v683, %v682
    %vm685 = vcmask 1041409
    %v686 = vsel %vm685, %v684, %v681
    %v688 = vadd.f32 %v653, %v686
    %vm689 = vcmask 123904
    %690 = vst.msk [vmem:[#allocation2] sm:$0x3] %vm689, %v688
    // Predicated region
    $region18: #{tpu_custom_call.1} parent=1 // pred_check
      %p691 = pneg %p15
    $region19: #{tpu_custom_call.1} parent=1 // pred_check_branch
      %693 = sbr.rel (%p691) target = $region21
    $region20: #{tpu_custom_call.1} parent=1 // pred_region
      %v694 = vld [vmem:[#allocation2] sm:$0x3]
      %695 = vst.msk [vmem:[#allocation3] sm:$0x3] %vm689, %v694
    $region21: #{tpu_custom_call.1} parent=1 // pred_fallthru
      _
    // Predicated region
    $region22: #{tpu_custom_call.1} parent=1 // pred_check
      _
    $region23: #{tpu_custom_call.1} parent=1 // pred_check_branch
      %697 = sbr.rel (0) target = $region25
    $region24: #{tpu_custom_call.1} parent=1 // pred_region
      %699 = vsyncadd [#allocation4], 0
      %s701 = sshll.u32 [#allocation3], 4
      %s702 = int_to_ptr.vmem [resolvable:$true] %s701
      %s703 = sshll.u32 %s3, 4
      %s704 = int_to_ptr.hbm [resolvable:$true] %s703
      %706 = dma.vmem_to_hbm [thread:$0]  %s702, 32, %s704, [#allocation4]
    $region25: #{tpu_custom_call.1} parent=1 // pred_fallthru
      _
    // Predicated region
    $region26: #{tpu_custom_call.1} parent=1 // pred_check
      _
    $region27: #{tpu_custom_call.1} parent=1 // pred_check_branch
      %708 = sbr.rel (0) target = $region29
    $region28: #{tpu_custom_call.1} parent=1 // pred_region
      %710 = dma.done [#allocation4], 32
    $region29: #{tpu_custom_call.1} parent=1 // pred_fallthru
      _
    %711 = vsyncpa [#allocation4], 1

</llo_original>
